<compile_context>
chip_gen: v6e
topology: v6e:2x2x1
jax: 0.10.0
libtpu: 0.0.40
codegen_flags: <defaults>
</compile_context>

<pallas_src>
import functools

import jax
import jax.numpy as jnp
from jax import lax
from jax.experimental import pallas as pl
from jax.experimental.pallas import tpu as pltpu

EPS = 1e-7  # matches the module's epsilon parameter


# ---------------------------------------------------------------------------
# pose / intrinsics glue (tiny 3x3 algebra, plain JAX)
# ---------------------------------------------------------------------------
def _axis_rotation(axis, angle):
    c, s = jnp.cos(angle), jnp.sin(angle)
    one, zero = jnp.ones_like(angle), jnp.zeros_like(angle)
    if axis == "X":
        flat = (one, zero, zero, zero, c, -s, zero, s, c)
    elif axis == "Y":
        flat = (c, zero, s, zero, one, zero, -s, zero, c)
    else:  # "Z"
        flat = (c, -s, zero, s, c, zero, zero, zero, one)
    return jnp.stack(flat, axis=-1).reshape(angle.shape + (3, 3))


def euler_xyz_to_matrix(euler):  # (B, 3) -> (B, 3, 3), pytorch3d 'XYZ' convention
    return (_axis_rotation("X", euler[:, 0])
            @ _axis_rotation("Y", euler[:, 1])
            @ _axis_rotation("Z", euler[:, 2]))


def get_extrinsic_matrix(pose):  # (B, 6) -> (B, 3, 4)
    rot = euler_xyz_to_matrix(pose[:, :3])
    trans = pose[:, 3:].reshape(-1, 3, 1)
    return jnp.concatenate([rot, trans], axis=-1)


def _combined_projection_matrix(pose, K, K_inv):
    """M = (K @ [R|t]) @ (eye(4,3) @ K_inv), per batch, shape (B, 3, 3)."""
    B = pose.shape[0]
    pose_ext = get_extrinsic_matrix(pose)                       # (B,3,4)
    K3 = K.reshape(B, 3, 3)
    K3_inv = K_inv.reshape(B, 3, 3)
    eye43 = jnp.eye(4, 3, dtype=jnp.float32)                    # (4,3)
    hi = lax.Precision.HIGHEST
    kp = jnp.einsum("bij,bjk->bik", K3, pose_ext, precision=hi)          # (B,3,4)
    rki = jnp.einsum("ij,bjk->bik", eye43, K3_inv, precision=hi)         # (B,4,3)
    return jnp.einsum("bij,bjk->bik", kp, rki, precision=hi)             # (B,3,3)


# ---------------------------------------------------------------------------
# Pallas kernel: per-(batch, pixel-tile) projection + bilinear grid_sample
# ---------------------------------------------------------------------------
def _projection_kernel(H, W, H_in, W_in, C, TNR,
                       m_ref,      # scalar-prefetch SMEM: (B, 9) projection matrices
                       z_ref,      # VMEM (1, TNR, 128) depth tile
                       img_ref,    # VMEM (1, C*W_in, H_in) bf16, row index = c*W_in + x
                       out_ref):   # VMEM (1, C, TNR*128)
    b = pl.program_id(0)
    t = pl.program_id(1)
    TN = TNR * 128

    # ---- per-pixel projection math on a sublane-dense (TNR, 128) layout ----
    r_io = lax.broadcasted_iota(jnp.int32, (TNR, 128), 0)
    l_io = lax.broadcasted_iota(jnp.int32, (TNR, 128), 1)
    n = ((t * TNR + r_io) * 128 + l_io).astype(jnp.float32)   # flat pixel index
    # torch meshgrid('ij') then flatten:  x = n // H ,  y = n % H   (float-safe)
    xp = jnp.floor((n + 0.5) / float(H))
    yp = n - xp * float(H)

    z = z_ref[0]                                              # (TNR, 128)
    X = xp * z
    Y = yp * z
    m = [m_ref[b, k] for k in range(9)]
    px = m[0] * X + m[1] * Y + m[2] * z
    py = m[3] * X + m[4] * Y + m[5] * z
    pz = m[6] * X + m[7] * Y + m[8] * z
    inv = 1.0 / (pz + EPS)

    # normalized grid in [-1, 1], then grid_sample unnormalize (align_corners=False)
    gx = 2.0 * (px * inv) / float(W) - 1.0
    gy = 2.0 * (py * inv) / float(H) - 1.0
    ix = ((gx + 1.0) * float(W_in) - 1.0) * 0.5
    iy = ((gy + 1.0) * float(H_in) - 1.0) * 0.5
    ix = jnp.clip(ix, -4.0, float(W_in) + 4.0)   # keep the int cast well-defined
    iy = jnp.clip(iy, -4.0, float(H_in) + 4.0)

    x0f = jnp.floor(ix)
    y0f = jnp.floor(iy)
    wx1 = ix - x0f
    wx0 = 1.0 - wx1
    wy1 = iy - y0f
    wy0 = 1.0 - wy1
    x0 = x0f.astype(jnp.int32)
    x1 = x0 + 1
    y0 = y0f.astype(jnp.int32)
    y1 = y0 + 1
    # padding_mode='zeros': fold per-axis validity into the 1-D weights
    wx0 = jnp.where((x0 >= 0) & (x0 < W_in), wx0, 0.0)
    wx1 = jnp.where((x1 >= 0) & (x1 < W_in), wx1, 0.0)
    wy0 = jnp.where((y0 >= 0) & (y0 < H_in), wy0, 0.0)
    wy1 = jnp.where((y1 >= 0) & (y1 < H_in), wy1, 0.0)

    # ---- narrow one-hot blend matrices: (H_in, TN) rows, (W_in, TN) columns ----
    # Built per 128-lane sub-block (static unroll) and concatenated along lanes,
    # so no awkward sublane->lane relayout of the big matrices is needed.
    y_io = lax.broadcasted_iota(jnp.int32, (H_in, 128), 0)
    x_io = lax.broadcasted_iota(jnp.int32, (W_in, 128), 0)
    row_pieces = []
    col_pieces = []
    for r in range(TNR):
        y0r, y1r = y0[r:r + 1], y1[r:r + 1]
        x0r, x1r = x0[r:r + 1], x1[r:r + 1]
        row_pieces.append(
            jnp.where(y_io == y0r, wy0[r:r + 1],
                      jnp.where(y_io == y1r, wy1[r:r + 1], 0.0)))
        col_pieces.append(
            jnp.where(x_io == x0r, wx0[r:r + 1],
                      jnp.where(x_io == x1r, wx1[r:r + 1], 0.0)))
    roww = jnp.concatenate(row_pieces, axis=1)                 # (H_in, TN)
    colw = jnp.concatenate(col_pieces, axis=1)                 # (W_in, TN)

    # ---- stage 1: row gather+blend as ONE MXU matmul (bf16 in, f32 accumulate) ----
    g = jnp.dot(img_ref[0], roww.astype(jnp.bfloat16),
                preferred_element_type=jnp.float32)            # (C*W_in, TN)

    # ---- stage 2: column blend + per-channel reduction (exact f32, VPU) ----
    g3 = g.reshape(C, W_in, TN)
    out_ref[0] = jnp.sum(g3 * colw[None, :, :], axis=1)        # (C, TN), lane-dense


# ---------------------------------------------------------------------------
# Wrapper
# ---------------------------------------------------------------------------
def _pick_tile_rows(nr, c, h_in, w_in):
    """Rows (of 128 pixels each) per output tile.

    Must be a multiple of 8 (sublane tile) unless it covers the whole padded
    pixel range; sized so the (C*W_in, TN) stage-1/2 intermediates stay well
    inside scoped VMEM on all of v5e / v6e / v7x.
    """
    if nr <= 16:
        return nr
    per_row = 128 * 4 * (3 * c * w_in + 2 * (h_in + w_in))   # conservative f32 bytes
    budget = 20 * 1024 * 1024
    rows = int(budget // per_row) // 8 * 8
    return max(8, min(16, rows))


def projection_forward(img, z, pose, K, K_inv, *, height, width):
    B, C, H_in, W_in = img.shape
    H, W = height, width
    N = H * W
    assert z.shape == (B, 1, H, W)

    M_flat = _combined_projection_matrix(pose, K, K_inv).reshape(B, 9).astype(jnp.float32)

    NR = -(-N // 128)                         # 128-pixel rows
    TNR = _pick_tile_rows(NR, C, H_in, W_in)  # rows per tile
    NR_pad = -(-NR // TNR) * TNR
    N_pad = NR_pad * 128
    num_tiles = NR_pad // TNR
    TN = TNR * 128

    z_flat = z.reshape(B, N).astype(jnp.float32)
    if N_pad != N:
        z_flat = jnp.pad(z_flat, ((0, 0), (0, N_pad - N)), constant_values=1.0)
    z_tiles = z_flat.reshape(B, NR_pad, 128)

    # stage-1 LHS: rows indexed by (c*W_in + x), columns by y; bf16 halves HBM/VMEM
    img_t = (img.astype(jnp.float32)
             .transpose(0, 1, 3, 2)
             .reshape(B, C * W_in, H_in)
             .astype(jnp.bfloat16))

    kernel = functools.partial(_projection_kernel, H, W, H_in, W_in, C, TNR)
    grid_spec = pltpu.PrefetchScalarGridSpec(
        num_scalar_prefetch=1,
        grid=(B, num_tiles),
        in_specs=[
            pl.BlockSpec((1, TNR, 128), lambda b, t, m: (b, t, 0)),        # z tile
            pl.BlockSpec((1, C * W_in, H_in), lambda b, t, m: (b, 0, 0)),  # img (resident over t)
        ],
        out_specs=pl.BlockSpec((1, C, TN), lambda b, t, m: (b, 0, t)),
    )
    out_flat = pl.pallas_call(
        kernel,
        out_shape=jax.ShapeDtypeStruct((B, C, N_pad), jnp.float32),
        grid_spec=grid_spec,
        compiler_params=pltpu.CompilerParams(
            dimension_semantics=("parallel", "parallel"),
            vmem_limit_bytes=48 * 1024 * 1024,
        ),
    )(M_flat, z_tiles, img_t)
    return out_flat[:, :, :N].reshape(B, C, H, W)


# ---------------------------------------------------------------------------
# Pure-JAX reference (exact f32 gather) for verification
# ---------------------------------------------------------------------------
def projection_reference(img, z, pose, K, K_inv, *, height, width):
    B, C, H_in, W_in = img.shape
    H, W = height, width
    N = H * W
    n = jnp.arange(N, dtype=jnp.float32)[None, :]
    xp = jnp.floor((n + 0.5) / H)
    yp = n - xp * H
    zf = z.reshape(B, N)
    X, Y, Z = xp * zf, yp * zf, zf

    M = _combined_projection_matrix(pose, K, K_inv)
    px = M[:, 0, 0, None] * X + M[:, 0, 1, None] * Y + M[:, 0, 2, None] * Z
    py = M[:, 1, 0, None] * X + M[:, 1, 1, None] * Y + M[:, 1, 2, None] * Z
    pz = M[:, 2, 0, None] * X + M[:, 2, 1, None] * Y + M[:, 2, 2, None] * Z
    inv = 1.0 / (pz + EPS)
    gx = 2.0 * (px * inv) / W - 1.0
    gy = 2.0 * (py * inv) / H - 1.0
    ix = ((gx + 1.0) * W_in - 1.0) * 0.5
    iy = ((gy + 1.0) * H_in - 1.0) * 0.5
    ix = jnp.clip(ix, -4.0, W_in + 4.0)
    iy = jnp.clip(iy, -4.0, H_in + 4.0)
    x0f, y0f = jnp.floor(ix), jnp.floor(iy)
    wx1, wy1 = ix - x0f, iy - y0f
    wx0, wy0 = 1.0 - wx1, 1.0 - wy1
    x0 = x0f.astype(jnp.int32); x1 = x0 + 1
    y0 = y0f.astype(jnp.int32); y1 = y0 + 1
    img_flat = img.reshape(B, C, H_in * W_in)

    def gather(xi, yi, w):
        valid = (xi >= 0) & (xi < W_in) & (yi >= 0) & (yi < H_in)
        xi_c = jnp.clip(xi, 0, W_in - 1)
        yi_c = jnp.clip(yi, 0, H_in - 1)
        idx = (yi_c * W_in + xi_c)[:, None, :]
        vals = jnp.take_along_axis(img_flat, jnp.broadcast_to(idx, (B, C, N)), axis=2)
        return vals * jnp.where(valid, w, 0.0)[:, None, :]

    out = (gather(x0, y0, wx0 * wy0) + gather(x1, y0, wx1 * wy0)
           + gather(x0, y1, wx0 * wy1) + gather(x1, y1, wx1 * wy1))
    return out.reshape(B, C, H, W)


if __name__ == "__main__":
    def run_case(key, B, C, H_in, W_in, H, W):
        k1, k2, k3 = jax.random.split(key, 3)
        img = jax.random.normal(k1, (B, C, H_in, W_in), dtype=jnp.float32)
        zz = jax.random.uniform(k2, (B, 1, H, W), minval=0.5, maxval=2.0, dtype=jnp.float32)
        angles = jax.random.uniform(k3, (B, 3), minval=-0.1, maxval=0.1, dtype=jnp.float32)
        trans = jnp.tile(jnp.array([[0.05, -0.02, 0.10]], dtype=jnp.float32), (B, 1))
        pose = jnp.concatenate([angles, trans], axis=-1)

        f = float(W)
        K3 = jnp.array([[f, 0.0, W / 2.0],
                        [0.0, f, H / 2.0],
                        [0.0, 0.0, 1.0]], dtype=jnp.float32)
        K = jnp.broadcast_to(K3, (B, 3, 3)).reshape(B, 1, 3, 3)
        K_inv = jnp.broadcast_to(jnp.linalg.inv(K3), (B, 3, 3)).reshape(B, 1, 3, 3)

        out = projection_forward(img, zz, pose, K, K_inv, height=H, width=W)
        out = jax.block_until_ready(out)
        ref = projection_reference(img, zz, pose, K, K_inv, height=H, width=W)
        assert out.shape == (B, C, H, W)
        err = float(jnp.max(jnp.abs(out - ref)))
        # stage-1 runs in bf16 on the MXU (f32 accumulate); bilinear weights sum
        # to <= 1, so the error stays around 1e-2 -- verified here at 3e-2.
        assert jnp.allclose(out, ref, atol=3e-2, rtol=3e-2), f"max abs err {err}"

    key = jax.random.PRNGKey(0)
    ka, kb = jax.random.split(key)
    run_case(ka, B=2, C=4, H_in=16, W_in=16, H=16, W=16)   # N is a multiple of 128
    run_case(kb, B=1, C=3, H_in=16, W_in=16, H=20, W=20)   # exercises pixel padding
    print("KERNEL_OK")
</pallas_src>

<mosaic_0001>
module attributes {stable_mosaic.version = 11 : i64} {
  func.func @_projection_kernel(%arg0: i32, %arg1: i32, %arg2: memref<2x9xf32, #tpu.memory_space<smem>>, %arg3: memref<1x2x128xf32, #tpu.memory_space<vmem>>, %arg4: memref<1x64x16xbf16, #tpu.memory_space<vmem>>, %arg5: memref<1x4x256xf32, #tpu.memory_space<vmem>>) attributes {dimension_semantics = [#tpu.dimension_semantics<parallel>, #tpu.dimension_semantics<parallel>], iteration_bounds = array<i64: 2, 1>, scalar_prefetch = 1 : i64, scratch_operands = 0 : i64, tpu.core_type = #tpu.core_type<tc>, window_params = [{transform_indices = @transform_0, window_bounds = array<i64: 1, 2, 128>}, {transform_indices = @transform_1, window_bounds = array<i64: 1, 64, 16>}, {transform_indices = @transform_2, window_bounds = array<i64: 1, 4, 256>}]} {
    %0 = tpu.iota {dimensions = array<i32: 0>} : vector<2x128xi32>
    %1 = tpu.iota {dimensions = array<i32: 1>} : vector<2x128xi32>
    %c2_i32 = arith.constant 2 : i32
    %2 = arith.muli %arg1, %c2_i32 : i32
    %3 = vector.broadcast %2 : i32 to vector<2x128xi32>
    %4 = arith.addi %3, %0 : vector<2x128xi32>
    %c128_i32 = arith.constant 128 : i32
    %5 = vector.broadcast %c128_i32 : i32 to vector<2x128xi32>
    %6 = arith.muli %4, %5 : vector<2x128xi32>
    %7 = arith.addi %6, %1 : vector<2x128xi32>
    %8 = arith.sitofp %7 : vector<2x128xi32> to vector<2x128xf32>
    %cst = arith.constant 5.000000e-01 : f32
    %9 = vector.broadcast %cst : f32 to vector<2x128xf32>
    %10 = arith.addf %8, %9 : vector<2x128xf32>
    %cst_0 = arith.constant 1.600000e+01 : f32
    %11 = vector.broadcast %cst_0 : f32 to vector<2x128xf32>
    %12 = arith.divf %10, %11 : vector<2x128xf32>
    %13 = math.floor %12 : vector<2x128xf32>
    %cst_1 = arith.constant 1.600000e+01 : f32
    %14 = vector.broadcast %cst_1 : f32 to vector<2x128xf32>
    %15 = arith.mulf %13, %14 : vector<2x128xf32>
    %16 = arith.subf %8, %15 : vector<2x128xf32>
    %c0 = arith.constant 0 : index
    %c0_2 = arith.constant 0 : index
    %c0_3 = arith.constant 0 : index
    %17 = vector.load %arg3[%c0, %c0_2, %c0_3] : memref<1x2x128xf32, #tpu.memory_space<vmem>>, vector<1x2x128xf32>
    %18 = vector.shape_cast %17 : vector<1x2x128xf32> to vector<2x128xf32>
    %19 = arith.mulf %13, %18 : vector<2x128xf32>
    %20 = arith.mulf %16, %18 : vector<2x128xf32>
    %21 = arith.index_cast %arg0 : i32 to index
    %c0_4 = arith.constant 0 : index
    %22 = memref.load %arg2[%21, %c0_4] : memref<2x9xf32, #tpu.memory_space<smem>>
    %23 = arith.index_cast %arg0 : i32 to index
    %c1 = arith.constant 1 : index
    %24 = memref.load %arg2[%23, %c1] : memref<2x9xf32, #tpu.memory_space<smem>>
    %25 = arith.index_cast %arg0 : i32 to index
    %c2 = arith.constant 2 : index
    %26 = memref.load %arg2[%25, %c2] : memref<2x9xf32, #tpu.memory_space<smem>>
    %27 = arith.index_cast %arg0 : i32 to index
    %c3 = arith.constant 3 : index
    %28 = memref.load %arg2[%27, %c3] : memref<2x9xf32, #tpu.memory_space<smem>>
    %29 = arith.index_cast %arg0 : i32 to index
    %c4 = arith.constant 4 : index
    %30 = memref.load %arg2[%29, %c4] : memref<2x9xf32, #tpu.memory_space<smem>>
    %31 = arith.index_cast %arg0 : i32 to index
    %c5 = arith.constant 5 : index
    %32 = memref.load %arg2[%31, %c5] : memref<2x9xf32, #tpu.memory_space<smem>>
    %33 = arith.index_cast %arg0 : i32 to index
    %c6 = arith.constant 6 : index
    %34 = memref.load %arg2[%33, %c6] : memref<2x9xf32, #tpu.memory_space<smem>>
    %35 = arith.index_cast %arg0 : i32 to index
    %c7 = arith.constant 7 : index
    %36 = memref.load %arg2[%35, %c7] : memref<2x9xf32, #tpu.memory_space<smem>>
    %37 = arith.index_cast %arg0 : i32 to index
    %c8 = arith.constant 8 : index
    %38 = memref.load %arg2[%37, %c8] : memref<2x9xf32, #tpu.memory_space<smem>>
    %39 = vector.broadcast %22 : f32 to vector<2x128xf32>
    %40 = arith.mulf %39, %19 : vector<2x128xf32>
    %41 = vector.broadcast %24 : f32 to vector<2x128xf32>
    %42 = arith.mulf %41, %20 : vector<2x128xf32>
    %43 = arith.addf %40, %42 : vector<2x128xf32>
    %44 = vector.broadcast %26 : f32 to vector<2x128xf32>
    %45 = arith.mulf %44, %18 : vector<2x128xf32>
    %46 = arith.addf %43, %45 : vector<2x128xf32>
    %47 = vector.broadcast %28 : f32 to vector<2x128xf32>
    %48 = arith.mulf %47, %19 : vector<2x128xf32>
    %49 = vector.broadcast %30 : f32 to vector<2x128xf32>
    %50 = arith.mulf %49, %20 : vector<2x128xf32>
    %51 = arith.addf %48, %50 : vector<2x128xf32>
    %52 = vector.broadcast %32 : f32 to vector<2x128xf32>
    %53 = arith.mulf %52, %18 : vector<2x128xf32>
    %54 = arith.addf %51, %53 : vector<2x128xf32>
    %55 = vector.broadcast %34 : f32 to vector<2x128xf32>
    %56 = arith.mulf %55, %19 : vector<2x128xf32>
    %57 = vector.broadcast %36 : f32 to vector<2x128xf32>
    %58 = arith.mulf %57, %20 : vector<2x128xf32>
    %59 = arith.addf %56, %58 : vector<2x128xf32>
    %60 = vector.broadcast %38 : f32 to vector<2x128xf32>
    %61 = arith.mulf %60, %18 : vector<2x128xf32>
    %62 = arith.addf %59, %61 : vector<2x128xf32>
    %cst_5 = arith.constant 1.000000e-07 : f32
    %63 = vector.broadcast %cst_5 : f32 to vector<2x128xf32>
    %64 = arith.addf %62, %63 : vector<2x128xf32>
    %cst_6 = arith.constant 1.000000e+00 : f32
    %65 = vector.broadcast %cst_6 : f32 to vector<2x128xf32>
    %66 = arith.divf %65, %64 : vector<2x128xf32>
    %67 = arith.mulf %46, %66 : vector<2x128xf32>
    %cst_7 = arith.constant 2.000000e+00 : f32
    %68 = vector.broadcast %cst_7 : f32 to vector<2x128xf32>
    %69 = arith.mulf %68, %67 : vector<2x128xf32>
    %cst_8 = arith.constant 1.600000e+01 : f32
    %70 = vector.broadcast %cst_8 : f32 to vector<2x128xf32>
    %71 = arith.divf %69, %70 : vector<2x128xf32>
    %cst_9 = arith.constant 1.000000e+00 : f32
    %72 = vector.broadcast %cst_9 : f32 to vector<2x128xf32>
    %73 = arith.subf %71, %72 : vector<2x128xf32>
    %74 = arith.mulf %54, %66 : vector<2x128xf32>
    %cst_10 = arith.constant 2.000000e+00 : f32
    %75 = vector.broadcast %cst_10 : f32 to vector<2x128xf32>
    %76 = arith.mulf %75, %74 : vector<2x128xf32>
    %cst_11 = arith.constant 1.600000e+01 : f32
    %77 = vector.broadcast %cst_11 : f32 to vector<2x128xf32>
    %78 = arith.divf %76, %77 : vector<2x128xf32>
    %cst_12 = arith.constant 1.000000e+00 : f32
    %79 = vector.broadcast %cst_12 : f32 to vector<2x128xf32>
    %80 = arith.subf %78, %79 : vector<2x128xf32>
    %cst_13 = arith.constant 1.000000e+00 : f32
    %81 = vector.broadcast %cst_13 : f32 to vector<2x128xf32>
    %82 = arith.addf %73, %81 : vector<2x128xf32>
    %cst_14 = arith.constant 1.600000e+01 : f32
    %83 = vector.broadcast %cst_14 : f32 to vector<2x128xf32>
    %84 = arith.mulf %82, %83 : vector<2x128xf32>
    %cst_15 = arith.constant 1.000000e+00 : f32
    %85 = vector.broadcast %cst_15 : f32 to vector<2x128xf32>
    %86 = arith.subf %84, %85 : vector<2x128xf32>
    %cst_16 = arith.constant 5.000000e-01 : f32
    %87 = vector.broadcast %cst_16 : f32 to vector<2x128xf32>
    %88 = arith.mulf %86, %87 : vector<2x128xf32>
    %cst_17 = arith.constant 1.000000e+00 : f32
    %89 = vector.broadcast %cst_17 : f32 to vector<2x128xf32>
    %90 = arith.addf %80, %89 : vector<2x128xf32>
    %cst_18 = arith.constant 1.600000e+01 : f32
    %91 = vector.broadcast %cst_18 : f32 to vector<2x128xf32>
    %92 = arith.mulf %90, %91 : vector<2x128xf32>
    %cst_19 = arith.constant 1.000000e+00 : f32
    %93 = vector.broadcast %cst_19 : f32 to vector<2x128xf32>
    %94 = arith.subf %92, %93 : vector<2x128xf32>
    %cst_20 = arith.constant 5.000000e-01 : f32
    %95 = vector.broadcast %cst_20 : f32 to vector<2x128xf32>
    %96 = arith.mulf %94, %95 : vector<2x128xf32>
    %cst_21 = arith.constant -4.000000e+00 : f32
    %cst_22 = arith.constant 2.000000e+01 : f32
    %97 = vector.broadcast %cst_21 : f32 to vector<2x128xf32>
    %98 = arith.maximumf %97, %88 : vector<2x128xf32>
    %99 = vector.broadcast %cst_22 : f32 to vector<2x128xf32>
    %100 = arith.minimumf %99, %98 : vector<2x128xf32>
    %cst_23 = arith.constant -4.000000e+00 : f32
    %cst_24 = arith.constant 2.000000e+01 : f32
    %101 = vector.broadcast %cst_23 : f32 to vector<2x128xf32>
    %102 = arith.maximumf %101, %96 : vector<2x128xf32>
    %103 = vector.broadcast %cst_24 : f32 to vector<2x128xf32>
    %104 = arith.minimumf %103, %102 : vector<2x128xf32>
    %105 = math.floor %100 : vector<2x128xf32>
    %106 = math.floor %104 : vector<2x128xf32>
    %107 = arith.subf %100, %105 : vector<2x128xf32>
    %cst_25 = arith.constant 1.000000e+00 : f32
    %108 = vector.broadcast %cst_25 : f32 to vector<2x128xf32>
    %109 = arith.subf %108, %107 : vector<2x128xf32>
    %110 = arith.subf %104, %106 : vector<2x128xf32>
    %cst_26 = arith.constant 1.000000e+00 : f32
    %111 = vector.broadcast %cst_26 : f32 to vector<2x128xf32>
    %112 = arith.subf %111, %110 : vector<2x128xf32>
    %113 = arith.fptosi %105 : vector<2x128xf32> to vector<2x128xi32>
    %c1_i32 = arith.constant 1 : i32
    %114 = vector.broadcast %c1_i32 : i32 to vector<2x128xi32>
    %115 = arith.addi %113, %114 : vector<2x128xi32>
    %116 = arith.fptosi %106 : vector<2x128xf32> to vector<2x128xi32>
    %c1_i32_27 = arith.constant 1 : i32
    %117 = vector.broadcast %c1_i32_27 : i32 to vector<2x128xi32>
    %118 = arith.addi %116, %117 : vector<2x128xi32>
    %c0_i32 = arith.constant 0 : i32
    %119 = vector.broadcast %c0_i32 : i32 to vector<2x128xi32>
    %120 = arith.cmpi sge, %113, %119 : vector<2x128xi32>
    %c16_i32 = arith.constant 16 : i32
    %121 = vector.broadcast %c16_i32 : i32 to vector<2x128xi32>
    %122 = arith.cmpi slt, %113, %121 : vector<2x128xi32>
    %123 = arith.andi %120, %122 : vector<2x128xi1>
    %cst_28 = arith.constant 0.000000e+00 : f32
    %124 = vector.broadcast %cst_28 : f32 to vector<2x128xf32>
    %125 = arith.select %123, %109, %124 : vector<2x128xi1>, vector<2x128xf32>
    %c0_i32_29 = arith.constant 0 : i32
    %126 = vector.broadcast %c0_i32_29 : i32 to vector<2x128xi32>
    %127 = arith.cmpi sge, %115, %126 : vector<2x128xi32>
    %c16_i32_30 = arith.constant 16 : i32
    %128 = vector.broadcast %c16_i32_30 : i32 to vector<2x128xi32>
    %129 = arith.cmpi slt, %115, %128 : vector<2x128xi32>
    %130 = arith.andi %127, %129 : vector<2x128xi1>
    %cst_31 = arith.constant 0.000000e+00 : f32
    %131 = vector.broadcast %cst_31 : f32 to vector<2x128xf32>
    %132 = arith.select %130, %107, %131 : vector<2x128xi1>, vector<2x128xf32>
    %c0_i32_32 = arith.constant 0 : i32
    %133 = vector.broadcast %c0_i32_32 : i32 to vector<2x128xi32>
    %134 = arith.cmpi sge, %116, %133 : vector<2x128xi32>
    %c16_i32_33 = arith.constant 16 : i32
    %135 = vector.broadcast %c16_i32_33 : i32 to vector<2x128xi32>
    %136 = arith.cmpi slt, %116, %135 : vector<2x128xi32>
    %137 = arith.andi %134, %136 : vector<2x128xi1>
    %cst_34 = arith.constant 0.000000e+00 : f32
    %138 = vector.broadcast %cst_34 : f32 to vector<2x128xf32>
    %139 = arith.select %137, %112, %138 : vector<2x128xi1>, vector<2x128xf32>
    %c0_i32_35 = arith.constant 0 : i32
    %140 = vector.broadcast %c0_i32_35 : i32 to vector<2x128xi32>
    %141 = arith.cmpi sge, %118, %140 : vector<2x128xi32>
    %c16_i32_36 = arith.constant 16 : i32
    %142 = vector.broadcast %c16_i32_36 : i32 to vector<2x128xi32>
    %143 = arith.cmpi slt, %118, %142 : vector<2x128xi32>
    %144 = arith.andi %141, %143 : vector<2x128xi1>
    %cst_37 = arith.constant 0.000000e+00 : f32
    %145 = vector.broadcast %cst_37 : f32 to vector<2x128xf32>
    %146 = arith.select %144, %110, %145 : vector<2x128xi1>, vector<2x128xf32>
    %147 = tpu.iota {dimensions = array<i32: 0>} : vector<16x128xi32>
    %148 = tpu.iota {dimensions = array<i32: 0>} : vector<16x128xi32>
    %149 = vector.extract_strided_slice %116 {offsets = [0, 0], sizes = [1, 128], strides = [1, 1]} : vector<2x128xi32> to vector<1x128xi32>
    %150 = vector.extract_strided_slice %118 {offsets = [0, 0], sizes = [1, 128], strides = [1, 1]} : vector<2x128xi32> to vector<1x128xi32>
    %151 = vector.extract_strided_slice %113 {offsets = [0, 0], sizes = [1, 128], strides = [1, 1]} : vector<2x128xi32> to vector<1x128xi32>
    %152 = vector.extract_strided_slice %115 {offsets = [0, 0], sizes = [1, 128], strides = [1, 1]} : vector<2x128xi32> to vector<1x128xi32>
    %153 = vector.broadcast %149 : vector<1x128xi32> to vector<16x128xi32>
    %154 = arith.cmpi eq, %147, %153 : vector<16x128xi32>
    %155 = vector.extract_strided_slice %139 {offsets = [0, 0], sizes = [1, 128], strides = [1, 1]} : vector<2x128xf32> to vector<1x128xf32>
    %156 = vector.broadcast %150 : vector<1x128xi32> to vector<16x128xi32>
    %157 = arith.cmpi eq, %147, %156 : vector<16x128xi32>
    %158 = vector.extract_strided_slice %146 {offsets = [0, 0], sizes = [1, 128], strides = [1, 1]} : vector<2x128xf32> to vector<1x128xf32>
    %cst_38 = arith.constant 0.000000e+00 : f32
    %159 = vector.shape_cast %158 : vector<1x128xf32> to vector<1x128xf32>
    %160 = vector.broadcast %159 : vector<1x128xf32> to vector<16x128xf32>
    %161 = vector.broadcast %cst_38 : f32 to vector<16x128xf32>
    %162 = arith.select %157, %160, %161 : vector<16x128xi1>, vector<16x128xf32>
    %163 = vector.shape_cast %155 : vector<1x128xf32> to vector<1x128xf32>
    %164 = vector.broadcast %163 : vector<1x128xf32> to vector<16x128xf32>
    %165 = arith.select %154, %164, %162 : vector<16x128xi1>, vector<16x128xf32>
    %166 = vector.broadcast %151 : vector<1x128xi32> to vector<16x128xi32>
    %167 = arith.cmpi eq, %148, %166 : vector<16x128xi32>
    %168 = vector.extract_strided_slice %125 {offsets = [0, 0], sizes = [1, 128], strides = [1, 1]} : vector<2x128xf32> to vector<1x128xf32>
    %169 = vector.broadcast %152 : vector<1x128xi32> to vector<16x128xi32>
    %170 = arith.cmpi eq, %148, %169 : vector<16x128xi32>
    %171 = vector.extract_strided_slice %132 {offsets = [0, 0], sizes = [1, 128], strides = [1, 1]} : vector<2x128xf32> to vector<1x128xf32>
    %cst_39 = arith.constant 0.000000e+00 : f32
    %172 = vector.shape_cast %171 : vector<1x128xf32> to vector<1x128xf32>
    %173 = vector.broadcast %172 : vector<1x128xf32> to vector<16x128xf32>
    %174 = vector.broadcast %cst_39 : f32 to vector<16x128xf32>
    %175 = arith.select %170, %173, %174 : vector<16x128xi1>, vector<16x128xf32>
    %176 = vector.shape_cast %168 : vector<1x128xf32> to vector<1x128xf32>
    %177 = vector.broadcast %176 : vector<1x128xf32> to vector<16x128xf32>
    %178 = arith.select %167, %177, %175 : vector<16x128xi1>, vector<16x128xf32>
    %179 = vector.extract_strided_slice %116 {offsets = [1, 0], sizes = [1, 128], strides = [1, 1]} : vector<2x128xi32> to vector<1x128xi32>
    %180 = vector.extract_strided_slice %118 {offsets = [1, 0], sizes = [1, 128], strides = [1, 1]} : vector<2x128xi32> to vector<1x128xi32>
    %181 = vector.extract_strided_slice %113 {offsets = [1, 0], sizes = [1, 128], strides = [1, 1]} : vector<2x128xi32> to vector<1x128xi32>
    %182 = vector.extract_strided_slice %115 {offsets = [1, 0], sizes = [1, 128], strides = [1, 1]} : vector<2x128xi32> to vector<1x128xi32>
    %183 = vector.broadcast %179 : vector<1x128xi32> to vector<16x128xi32>
    %184 = arith.cmpi eq, %147, %183 : vector<16x128xi32>
    %185 = vector.extract_strided_slice %139 {offsets = [1, 0], sizes = [1, 128], strides = [1, 1]} : vector<2x128xf32> to vector<1x128xf32>
    %186 = vector.broadcast %180 : vector<1x128xi32> to vector<16x128xi32>
    %187 = arith.cmpi eq, %147, %186 : vector<16x128xi32>
    %188 = vector.extract_strided_slice %146 {offsets = [1, 0], sizes = [1, 128], strides = [1, 1]} : vector<2x128xf32> to vector<1x128xf32>
    %cst_40 = arith.constant 0.000000e+00 : f32
    %189 = vector.shape_cast %188 : vector<1x128xf32> to vector<1x128xf32>
    %190 = vector.broadcast %189 : vector<1x128xf32> to vector<16x128xf32>
    %191 = vector.broadcast %cst_40 : f32 to vector<16x128xf32>
    %192 = arith.select %187, %190, %191 : vector<16x128xi1>, vector<16x128xf32>
    %193 = vector.shape_cast %185 : vector<1x128xf32> to vector<1x128xf32>
    %194 = vector.broadcast %193 : vector<1x128xf32> to vector<16x128xf32>
    %195 = arith.select %184, %194, %192 : vector<16x128xi1>, vector<16x128xf32>
    %196 = vector.broadcast %181 : vector<1x128xi32> to vector<16x128xi32>
    %197 = arith.cmpi eq, %148, %196 : vector<16x128xi32>
    %198 = vector.extract_strided_slice %125 {offsets = [1, 0], sizes = [1, 128], strides = [1, 1]} : vector<2x128xf32> to vector<1x128xf32>
    %199 = vector.broadcast %182 : vector<1x128xi32> to vector<16x128xi32>
    %200 = arith.cmpi eq, %148, %199 : vector<16x128xi32>
    %201 = vector.extract_strided_slice %132 {offsets = [1, 0], sizes = [1, 128], strides = [1, 1]} : vector<2x128xf32> to vector<1x128xf32>
    %cst_41 = arith.constant 0.000000e+00 : f32
    %202 = vector.shape_cast %201 : vector<1x128xf32> to vector<1x128xf32>
    %203 = vector.broadcast %202 : vector<1x128xf32> to vector<16x128xf32>
    %204 = vector.broadcast %cst_41 : f32 to vector<16x128xf32>
    %205 = arith.select %200, %203, %204 : vector<16x128xi1>, vector<16x128xf32>
    %206 = vector.shape_cast %198 : vector<1x128xf32> to vector<1x128xf32>
    %207 = vector.broadcast %206 : vector<1x128xf32> to vector<16x128xf32>
    %208 = arith.select %197, %207, %205 : vector<16x128xi1>, vector<16x128xf32>
    %209 = tpu.concatenate %165, %195 in 1 : vector<16x128xf32>, vector<16x128xf32> -> vector<16x256xf32>
    %210 = tpu.concatenate %178, %208 in 1 : vector<16x128xf32>, vector<16x128xf32> -> vector<16x256xf32>
    %c0_42 = arith.constant 0 : index
    %c0_43 = arith.constant 0 : index
    %c0_44 = arith.constant 0 : index
    %211 = vector.load %arg4[%c0_42, %c0_43, %c0_44] : memref<1x64x16xbf16, #tpu.memory_space<vmem>>, vector<1x64x16xbf16>
    %212 = vector.shape_cast %211 : vector<1x64x16xbf16> to vector<64x16xbf16>
    %213 = arith.truncf %209 : vector<16x256xf32> to vector<16x256xbf16>
    %cst_45 = arith.constant dense<0.000000e+00> : vector<64x256xf32>
    %214 = tpu.matmul %212, %213, %cst_45 {dimension_numbers = #tpu.dot_dimension_numbers<[1], [0], [0], [1], [0, 0, 1, 1], [], []>} : vector<64x16xbf16>, vector<16x256xbf16>, vector<64x256xf32> -> vector<64x256xf32>
    %215 = vector.shape_cast %214 : vector<64x256xf32> to vector<4x16x256xf32>
    %216 = vector.shape_cast %210 : vector<16x256xf32> to vector<1x16x256xf32>
    %217 = vector.broadcast %216 : vector<1x16x256xf32> to vector<4x16x256xf32>
    %218 = arith.mulf %215, %217 : vector<4x16x256xf32>
    %cst_46 = arith.constant dense<0.000000e+00> : vector<4x256xf32>
    %219 = vector.multi_reduction <add>, %218, %cst_46 [1] : vector<4x16x256xf32> to vector<4x256xf32>
    %c0_47 = arith.constant 0 : index
    %c0_48 = arith.constant 0 : index
    %c0_49 = arith.constant 0 : index
    %220 = vector.load %arg5[%c0_47, %c0_48, %c0_49] : memref<1x4x256xf32, #tpu.memory_space<vmem>>, vector<1x4x256xf32>
    %221 = vector.shape_cast %220 : vector<1x4x256xf32> to vector<4x256xf32>
    %222 = vector.shape_cast %219 : vector<4x256xf32> to vector<1x4x256xf32>
    tpu.vector_store %arg5[%c0_47, %c0_48, %c0_49], %222 {strides = array<i32>} : memref<1x4x256xf32, #tpu.memory_space<vmem>>, vector<1x4x256xf32>,
    return
  }
  func.func @transform_0(%arg0: i32, %arg1: i32, %arg2: memref<2x9xf32, #tpu.memory_space<smem>>) -> (i32, i32, i32) {
    %c0_i32 = arith.constant 0 : i32
    %c0_i32_0 = arith.constant 0 : i32
    return %arg0, %arg1, %c0_i32 : i32, i32, i32
  }
  func.func @transform_1(%arg0: i32, %arg1: i32, %arg2: memref<2x9xf32, #tpu.memory_space<smem>>) -> (i32, i32, i32) {
    %c0_i32 = arith.constant 0 : i32
    %c0_i32_0 = arith.constant 0 : i32
    %c0_i32_1 = arith.constant 0 : i32
    return %arg0, %c0_i32, %c0_i32_0 : i32, i32, i32
  }
  func.func @transform_2(%arg0: i32, %arg1: i32, %arg2: memref<2x9xf32, #tpu.memory_space<smem>>) -> (i32, i32, i32) {
    %c0_i32 = arith.constant 0 : i32
    %c0_i32_0 = arith.constant 0 : i32
    return %arg0, %c0_i32, %arg1 : i32, i32, i32
  }
}

</mosaic_0001>

<llo_original>
// kernel: tpu_custom_call.1
$region0: #{tpu_custom_call.1}
  #allocation0 [shape = 'u32[]', space=smem, size = 0x4, offset = 0x4, fixed_abs, tag = 'smem constant byte address 0x4 - core index']
  #allocation1 [shape = 'u32[144,128]{1,0:T(1,128)}', space=vmem, size = 0x12000, scoped, tag = 'internal scratch']
  #allocation2 [shape = 's32[1]{0}', space=sflag, size = 0x4, scoped, tag = 'scoped memory for tpu_custom_call.1']
  #allocation3 [shape = 'u8[1024]{0}', space=smem, size = 0x400, scoped, tag = 'prefetched SMEM operand 0']
  %s0 = inlined_call_operand.vmem [shape: f32[2,9], index: 0, kind: input, shape index: {}]
  %s1 = inlined_call_operand.vmem [shape: f32[2,2,128], index: 1, kind: input, shape index: {}]
  %s2 = inlined_call_operand.vmem [shape: bf16[2,64,16], index: 2, kind: input, shape index: {}]
  %s3 = inlined_call_operand.hbm [shape: f32[2,4,256], index: 3, kind: output, shape index: {}]
  %s4 = sld [smem:[#allocation0]]
  $region41: #{tpu_custom_call.1} parent=0
    _
  %s6 = ssub.s32 1, %s4
  %s7 = scalar_select 0, %s6, %s4
  %s8 = sshll.u32 %s0, 4
  %s9 = int_to_ptr.vmem [resolvable:$true] %s8
  %11 = dma.vmem_to_smem %s9, 32, [#allocation3], [#allocation2]
  %12 = dma.done [#allocation2], 32
  %13 = sfence
  $region1: #{tpu_custom_call.1} parent=0
    #allocation4 [shape = 'u8[8192]{0}', space=vmem, size = 0x2000, scoped, tag = 'output window, operand 0']
    #allocation5 [shape = 's32[2]{0}', space=sflag, size = 0x8, scoped, tag = 'scoped memory for tpu_custom_call.1']
    %14 = vsyncpa [#allocation5], 0
    %s15 = scalar_lea.sflag [#allocation5], 1
    %16 = vsyncpa %s15, 0
    loop: start=0, step=1, limit=4
    $region2: #{tpu_custom_call.1} parent=1 // loop_pre_header
      _
    $region3: #{tpu_custom_call.1} parent=1 // loop_header
      %s18 = sphi 0, %s22
      %p19 = scmp.ge.s32.totalorder %s18, 4
      %s25 = sphi 0, %s37
      %s26 = sphi 0, %s33
      %s27 = sphi 0, %s25
      %s28 = sphi 0, %s26
      %s29 = sphi 0, %s27
      %s30 = sphi 0, %s28
      %s42 = sphi 0, %s44
      %s45 = sphi 0, %s42
      %s46 = sphi 0, %s45
      %s62 = sphi 0, %s46
      %s68 = sphi 0, %s70
      %s71 = sphi 0, %s68
      %s72 = sphi 0, %s71
      %s88 = sphi 0, %s72
      %s96 = sphi 0, %s98
      %s99 = sphi 0, %s96
      %s100 = sphi 0, %s99
      %s116 = sphi 0, %s100
    $region4: #{tpu_custom_call.1} parent=1 // loop_header_branch
      %21 = sbr.rel (%p19) target = $region8
    $region5: #{tpu_custom_call.1} parent=1 // loop_body
      %s23 = ssub.s32 %s18, 1
      %s24 = ssub.s32 %s18, 2
      %s31 = sadd.s32 1, %s26
      %p32 = scmp.ge.s32.totalorder %s31, 1
      %s33 = scalar_select %p32, 0, %s31
      %s34 = sadd.s32 1, %s25
      %s35 = scalar_select %p32, %s34, %s25
      %p36 = scmp.ge.s32.totalorder %s35, 2
      %s37 = scalar_select %p36, 0, %s35
      %s38 = ssub.s32 %s25, %s37
      %s39 = ssub.s32 %s26, %s33
      %s40 = sor.u32 %s38, %s39
      %p41 = scmp.eq.s32.totalorder %s40, 0
      %s43 = sadd.s32 %s42, 1
      %s44 = scalar_select %p41, %s42, %s43
      %p47 = pneg %p41
      %p48 = scmp.eq.s32.totalorder %s18, 1
      %p49 = por %p47, %p48
      %p50 = scmp.ne.s32.totalorder %s42, %s45
      %p51 = scmp.eq.s32.totalorder %s18, 0
      %p52 = por %p50, %p51
      %p53 = scmp.ne.s32.totalorder %s42, %s45
      %p54 = scmp.eq.s32.totalorder %s23, 1
      %p55 = por %p53, %p54
      %p56 = scmp.ne.s32.totalorder %s45, %s46
      %p57 = scmp.eq.s32.totalorder %s23, 0
      %p58 = por %p56, %p57
      %p59 = scmp.ne.s32.totalorder %s45, %s46
      %p60 = scmp.eq.s32.totalorder %s24, 1
      %p61 = por %p59, %p60
      %p63 = scmp.ne.s32.totalorder %s46, %s62
      %p64 = scmp.eq.s32.totalorder %s24, 0
      %p65 = por %p63, %p64
      %s66 = ssub.s32 %s25, %s37
      %p67 = scmp.eq.s32.totalorder %s66, 0
      %s69 = sadd.s32 %s68, 1
      %s70 = scalar_select %p67, %s68, %s69
      %p73 = pneg %p67
      %p74 = scmp.eq.s32.totalorder %s18, 1
      %p75 = por %p73, %p74
      %p76 = scmp.ne.s32.totalorder %s68, %s71
      %p77 = scmp.eq.s32.totalorder %s18, 0
      %p78 = por %p76, %p77
      %p79 = scmp.ne.s32.totalorder %s68, %s71
      %p80 = scmp.eq.s32.totalorder %s23, 1
      %p81 = por %p79, %p80
      %p82 = scmp.ne.s32.totalorder %s71, %s72
      %p83 = scmp.eq.s32.totalorder %s23, 0
      %p84 = por %p82, %p83
      %p85 = scmp.ne.s32.totalorder %s71, %s72
      %p86 = scmp.eq.s32.totalorder %s24, 1
      %p87 = por %p85, %p86
      %p89 = scmp.ne.s32.totalorder %s72, %s88
      %p90 = scmp.eq.s32.totalorder %s24, 0
      %p91 = por %p89, %p90
      %s92 = ssub.s32 %s25, %s37
      %s93 = ssub.s32 %s26, %s33
      %s94 = sor.u32 %s92, %s93
      %p95 = scmp.eq.s32.totalorder %s94, 0
      %s97 = sadd.s32 %s96, 1
      %s98 = scalar_select %p95, %s96, %s97
      %p101 = pneg %p95
      %p102 = scmp.eq.s32.totalorder %s18, 1
      %p103 = por %p101, %p102
      %p104 = scmp.ne.s32.totalorder %s96, %s99
      %p105 = scmp.eq.s32.totalorder %s18, 0
      %p106 = por %p104, %p105
      %p107 = scmp.ne.s32.totalorder %s96, %s99
      %p108 = scmp.eq.s32.totalorder %s23, 1
      %p109 = por %p107, %p108
      %p110 = scmp.ne.s32.totalorder %s99, %s100
      %p111 = scmp.eq.s32.totalorder %s23, 0
      %p112 = por %p110, %p111
      %p113 = scmp.ne.s32.totalorder %s99, %s100
      %p114 = scmp.eq.s32.totalorder %s24, 1
      %p115 = por %p113, %p114
      %p117 = scmp.ne.s32.totalorder %s100, %s116
      %p118 = scmp.eq.s32.totalorder %s24, 0
      %p119 = por %p117, %p118
      %p120 = scmp.le.s32.totalorder 1, %s18
      %p121 = scmp.lt.s32.totalorder %s18, 3
      %p122 = pnand %p120, %p121
      %p123 = pneg %p122
      // Predicated region
      $region9: #{tpu_custom_call.1} parent=5 // pred_check
        _
      $region10: #{tpu_custom_call.1} parent=5 // pred_check_branch
        %125 = sbr.rel (%p122) target = $region12
      $region11: #{tpu_custom_call.1} parent=5 // pred_region
        %s126 = ssub.s32 %s18, 1
      $region12: #{tpu_custom_call.1} parent=5 // pred_fallthru
        _
      %p127 = scmp.lt.s32.totalorder %s18, 2
      // Predicated region
      $region13: #{tpu_custom_call.1} parent=5 // pred_check
        %p128 = pneg %p127
      $region14: #{tpu_custom_call.1} parent=5 // pred_check_branch
        %130 = sbr.rel (%p128) target = $region16
      $region15: #{tpu_custom_call.1} parent=5 // pred_region
        // Predicated region
        $region17: #{tpu_custom_call.1} parent=15 // pred_check
          %p131 = pneg %p52
        $region18: #{tpu_custom_call.1} parent=15 // pred_check_branch
          %133 = sbr.rel (%p131) target = $region20
        $region19: #{tpu_custom_call.1} parent=15 // pred_region
          %p134 = scmp.lt.s32.totalorder %s25, 1
          %s135 = scalar_select %p134, %s25, 1
          %p136 = scmp.lt.s32.totalorder %s26, 0
          %s137 = scalar_select %p136, %s26, 0
          %s138 = sadd.s32 %s137, %s135
          %s139 = smul.addr %s138, 2
          %s140 = scalar_lea.vmem %s1, %s139
        $region20: #{tpu_custom_call.1} parent=15 // pred_fallthru
          _
        // Predicated region
        $region21: #{tpu_custom_call.1} parent=15 // pred_check
          %p141 = pneg %p78
        $region22: #{tpu_custom_call.1} parent=15 // pred_check_branch
          %143 = sbr.rel (%p141) target = $region24
        $region23: #{tpu_custom_call.1} parent=15 // pred_region
          %p144 = scmp.lt.s32.totalorder %s25, 1
          %s145 = scalar_select %p144, %s25, 1
          %s146 = smul.addr %s145, 8
          %s147 = smul.addr %s146, 4
          %s148 = scalar_lea.vmem %s2, %s147
        $region24: #{tpu_custom_call.1} parent=15 // pred_fallthru
          _
      $region16: #{tpu_custom_call.1} parent=5 // pred_fallthru
        _
      %p149 = scmp.le.s32.totalorder 1, %s18
      %p150 = scmp.lt.s32.totalorder %s18, 3
      %p151 = pnand %p149, %p150
      %p152 = pneg %p151
      // Predicated region
      $region25: #{tpu_custom_call.1} parent=5 // pred_check
        _
      $region26: #{tpu_custom_call.1} parent=5 // pred_check_branch
        %154 = sbr.rel (%p151) target = $region28
      $region27: #{tpu_custom_call.1} parent=5 // pred_region
        %s155 = ssub.s32 %s18, 1
        %p156 = scmp.lt.s32.totalorder %s27, 1
        %s157 = scalar_select %p156, %s27, 1
        %p158 = scmp.lt.s32.totalorder %s28, 0
        %s159 = scalar_select %p158, %s28, 0
        %s160 = sadd.s32 %s159, %s157
        %s161 = smul.addr %s160, 2
        %s162 = scalar_lea.vmem %s1, %s161
        %p163 = pneg %p58
        %p164 = pneg %p55
        %p165 = scmp.lt.s32.totalorder %s27, 1
        %s166 = scalar_select %p165, %s27, 1
        %s167 = smul.addr %s166, 8
        %s168 = smul.addr %s167, 4
        %s169 = scalar_lea.vmem %s2, %s168
        %p170 = pneg %p84
        %p171 = pneg %p81
        %p172 = pneg %p112
        %p173 = pneg %p109
        %s174 = sand.u32 %s99, 1
        %s175 = scalar_lea.sflag [#allocation5], %s174
        %s176 = sand.u32 %s99, 1
        %s177 = smul.addr %s176, 8
        %s178 = scalar_lea.vmem [#allocation4], %s177
        %p179 = scmp.lt.s32.totalorder %s27, 1
        %s180 = scalar_select %p179, %s27, 1
        %p181 = scmp.lt.s32.totalorder %s28, 0
        %s182 = scalar_select %p181, %s28, 0
        %s183 = sadd.s32 %s182, %s180
        %s184 = smul.addr %s183, 2
        %s185 = scalar_lea.vmem %s1, %s184
        %p186 = scmp.lt.s32.totalorder %s27, 1
        %s187 = scalar_select %p186, %s27, 1
        %s188 = smul.addr %s187, 8
        %s189 = smul.addr %s188, 4
        %s190 = scalar_lea.vmem %s2, %s189
        %s191 = smul.u32 2, %s28
        %v193 = vlaneseq
        %v194 = vshrl.u32 %v193, 7
        %v195 = vlaneseq
        %v196 = vand.u32 %v195, 127
        %s197 = smul.u32 %s28, 2
        %v198 = vstv %s197
        %v199 = vadd.s32 %v198, %v194
        %v200 = vmul.u32 %v199, 128
        %v201 = vadd.s32 %v200, %v196
        %v202 = vcvt.s32.f32 %v201
        %v203 = vadd.f32 %v202, 0.5
        %v204 = vrcp.pop 16.0
        %v205 = vmul.f32 %v203, %v204
        %v206 = vfloor.f32 %v205
        %v207 = vmul.f32 %v206, 16.0
        %v208 = vsub.f32 %v202, %v207
        %v209 = vld [vmem:[%s185] sm:$0x3]
        %v210 = vmul.f32 %v206, %v209
        %v211 = vmul.f32 %v208, %v209
        %s212 = smul.u32 %s27, 128
        %s213 = sld [smem:[#allocation3 + %s212]]
        %s214 = sadd.s32 %s212, 1
        %s215 = sld [smem:[#allocation3 + %s214]]
        %s216 = sadd.s32 %s212, 2
        %s217 = sld [smem:[#allocation3 + %s216]]
        %s218 = sadd.s32 %s212, 3
        %s219 = sld [smem:[#allocation3 + %s218]]
        %s220 = sadd.s32 %s212, 4
        %s221 = sld [smem:[#allocation3 + %s220]]
        %s222 = sadd.s32 %s212, 5
        %s223 = sld [smem:[#allocation3 + %s222]]
        %s224 = sadd.s32 %s212, 6
        %s225 = sld [smem:[#allocation3 + %s224]]
        %s226 = sadd.s32 %s212, 7
        %s227 = sld [smem:[#allocation3 + %s226]]
        %s228 = sadd.s32 %s212, 8
        %s229 = sld [smem:[#allocation3 + %s228]]
        %v230 = vstv %s213
        %v231 = vmul.f32 %v230, %v210
        %v232 = vstv %s215
        %v233 = vmul.f32 %v232, %v211
        %v234 = vadd.f32 %v231, %v233
        %v235 = vstv %s217
        %v236 = vmul.f32 %v235, %v209
        %v237 = vadd.f32 %v234, %v236
        %v238 = vstv %s219
        %v239 = vmul.f32 %v238, %v210
        %v240 = vstv %s221
        %v241 = vmul.f32 %v240, %v211
        %v242 = vadd.f32 %v239, %v241
        %v243 = vstv %s223
        %v244 = vmul.f32 %v243, %v209
        %v245 = vadd.f32 %v242, %v244
        %v246 = vstv %s225
        %v247 = vmul.f32 %v246, %v210
        %v248 = vstv %s227
        %v249 = vmul.f32 %v248, %v211
        %v250 = vadd.f32 %v247, %v249
        %v251 = vstv %s229
        %v252 = vmul.f32 %v251, %v209
        %v253 = vadd.f32 %v250, %v252
        %v254 = vadd.f32 %v253, 1e-07
        %v255 = vrcp.pop %v254
        %v256 = vmul.f32 1.0, %v255
        %v257 = vmul.f32 %v237, %v256
        %v258 = vmul.f32 %v257, 2.0
        %v259 = vmul.f32 %v258, %v204
        %v260 = vsub.f32 %v259, 1.0
        %v261 = vmul.f32 %v245, %v256
        %v262 = vmul.f32 %v261, 2.0
        %v263 = vmul.f32 %v262, %v204
        %v264 = vsub.f32 %v263, 1.0
        %v265 = vadd.f32 %v260, 1.0
        %v266 = vmul.f32 %v265, 16.0
        %v267 = vsub.f32 %v266, 1.0
        %v268 = vmul.f32 %v267, 0.5
        %v269 = vadd.f32 %v264, 1.0
        %v270 = vmul.f32 %v269, 16.0
        %v271 = vsub.f32 %v270, 1.0
        %v272 = vmul.f32 %v271, 0.5
        %v273 = vmax.f32 %v268, -4.0
        %v274 = vmin.f32 %v273, 20.0
        %v275 = vmax.f32 %v272, -4.0
        %v276 = vmin.f32 %v275, 20.0
        %v277 = vfloor.f32 %v274
        %v278 = vfloor.f32 %v276
        %v279 = vsub.f32 %v274, %v277
        %v280 = vsub.f32 1.0, %v279
        %v281 = vsub.f32 %v276, %v278
        %v282 = vsub.f32 1.0, %v281
        %v283 = vcvt.f32.s32.to.zero.pseudo %v277
        %v284 = vadd.s32 %v283, 1
        %v285 = vcvt.f32.s32.to.zero.pseudo %v278
        %v286 = vadd.s32 %v285, 1
        %vm287 = vcmp.ge.s32.totalorder %v283, 0
        %vm288 = vcmp.lt.s32.totalorder %v283, 16
        %vm289 = vmand %vm287, %vm288
        %v290 = vsel %vm289, %v280, 0.0
        %vm291 = vcmp.ge.s32.totalorder %v284, 0
        %vm292 = vcmp.lt.s32.totalorder %v284, 16
        %vm293 = vmand %vm291, %vm292
        %v294 = vsel %vm293, %v279, 0.0
        %vm295 = vcmp.ge.s32.totalorder %v285, 0
        %vm296 = vcmp.lt.s32.totalorder %v285, 16
        %vm297 = vmand %vm295, %vm296
        %v298 = vsel %vm297, %v282, 0.0
        %vm299 = vcmp.ge.s32.totalorder %v286, 0
        %vm300 = vcmp.lt.s32.totalorder %v286, 16
        %vm301 = vmand %vm299, %vm300
        %v302 = vsel %vm301, %v281, 0.0
        %v303 = vadd.s32 %v194, 8
        %v304 = vlaneseq
        %v305 = vshrl.u32 %v304, 7
        %v306 = vsub.s32 0, %v305
        %v307 = vrot.slane %v285, %v306
        %vm308 = vcmp.eq.s32.totalorder %v194, %v307
        %vm309 = vcmp.eq.s32.totalorder %v303, %v307
        %v310 = vlaneseq
        %v311 = vshrl.u32 %v310, 7
        %v312 = vsub.s32 0, %v311
        %v313 = vrot.slane %v286, %v312
        %vm314 = vcmp.eq.s32.totalorder %v194, %v313
        %vm315 = vcmp.eq.s32.totalorder %v303, %v313
        %v316 = vlaneseq
        %v317 = vshrl.u32 %v316, 7
        %v318 = vsub.s32 0, %v317
        %v319 = vrot.slane %v302, %v318
        %v320 = vsel %vm314, %v319, 0.0
        %v321 = vsel %vm315, %v319, 0.0
        %v322 = vlaneseq
        %v323 = vshrl.u32 %v322, 7
        %v324 = vsub.s32 0, %v323
        %v325 = vrot.slane %v298, %v324
        %v326 = vsel %vm308, %v325, %v320
        %v327 = vsel %vm309, %v325, %v321
        %v328 = vlaneseq
        %v329 = vshrl.u32 %v328, 7
        %v330 = vsub.s32 0, %v329
        %v331 = vrot.slane %v283, %v330
        %vm332 = vcmp.eq.s32.totalorder %v194, %v331
        %vm333 = vcmp.eq.s32.totalorder %v303, %v331
        %v334 = vlaneseq
        %v335 = vshrl.u32 %v334, 7
        %v336 = vsub.s32 0, %v335
        %v337 = vrot.slane %v284, %v336
        %vm338 = vcmp.eq.s32.totalorder %v194, %v337
        %vm339 = vcmp.eq.s32.totalorder %v303, %v337
        %v340 = vlaneseq
        %v341 = vshrl.u32 %v340, 7
        %v342 = vsub.s32 0, %v341
        %v343 = vrot.slane %v294, %v342
        %v344 = vsel %vm338, %v343, 0.0
        %v345 = vsel %vm339, %v343, 0.0
        %v346 = vlaneseq
        %v347 = vshrl.u32 %v346, 7
        %v348 = vsub.s32 0, %v347
        %v349 = vrot.slane %v290, %v348
        %v350 = vsel %vm332, %v349, %v344
        %v351 = vsel %vm333, %v349, %v345
        %v352 = vlaneseq
        %v353 = vshrl.u32 %v352, 7
        %v354 = vsub.s32 1, %v353
        %v355 = vrot.slane %v285, %v354
        %vm356 = vcmp.eq.s32.totalorder %v194, %v355
        %vm357 = vcmp.eq.s32.totalorder %v303, %v355
        %v358 = vlaneseq
        %v359 = vshrl.u32 %v358, 7
        %v360 = vsub.s32 1, %v359
        %v361 = vrot.slane %v286, %v360
        %vm362 = vcmp.eq.s32.totalorder %v194, %v361
        %vm363 = vcmp.eq.s32.totalorder %v303, %v361
        %v364 = vlaneseq
        %v365 = vshrl.u32 %v364, 7
        %v366 = vsub.s32 1, %v365
        %v367 = vrot.slane %v302, %v366
        %v368 = vsel %vm362, %v367, 0.0
        %v369 = vsel %vm363, %v367, 0.0
        %v370 = vlaneseq
        %v371 = vshrl.u32 %v370, 7
        %v372 = vsub.s32 1, %v371
        %v373 = vrot.slane %v298, %v372
        %v374 = vsel %vm356, %v373, %v368
        %v375 = vsel %vm357, %v373, %v369
        %v376 = vlaneseq
        %v377 = vshrl.u32 %v376, 7
        %v378 = vsub.s32 1, %v377
        %v379 = vrot.slane %v283, %v378
        %vm380 = vcmp.eq.s32.totalorder %v194, %v379
        %vm381 = vcmp.eq.s32.totalorder %v303, %v379
        %v382 = vlaneseq
        %v383 = vshrl.u32 %v382, 7
        %v384 = vsub.s32 1, %v383
        %v385 = vrot.slane %v284, %v384
        %vm386 = vcmp.eq.s32.totalorder %v194, %v385
        %vm387 = vcmp.eq.s32.totalorder %v303, %v385
        %v388 = vlaneseq
        %v389 = vshrl.u32 %v388, 7
        %v390 = vsub.s32 1, %v389
        %v391 = vrot.slane %v294, %v390
        %v392 = vsel %vm386, %v391, 0.0
        %v393 = vsel %vm387, %v391, 0.0
        %v394 = vlaneseq
        %v395 = vshrl.u32 %v394, 7
        %v396 = vsub.s32 1, %v395
        %v397 = vrot.slane %v290, %v396
        %v398 = vsel %vm380, %v397, %v392
        %v399 = vsel %vm381, %v397, %v393
        %v400 = vld [vmem:[%s190] sm:$0xf]
        %v401 = vld [vmem:[%s190 + $0x4] sm:$0xf]
        %v402 = vld [vmem:[%s190 + $0x8] sm:$0xf]
        %v403 = vld [vmem:[%s190 + $0xc] sm:$0xf]
        %v404 = vld [vmem:[%s190 + $0x10] sm:$0xf]
        %v405 = vld [vmem:[%s190 + $0x14] sm:$0xf]
        %v406 = vld [vmem:[%s190 + $0x18] sm:$0xf]
        %v407 = vld [vmem:[%s190 + $0x1c] sm:$0xf]
        %v408 = vpack.c.bf16 %v327, %v326
        %v409 = vpack.c.bf16 %v375, %v374
        %v418 = vunpack.c.l.b16 %v400
        %v419 = vunpack.c.l.b16 %v401
        %v420 = vunpack.c.l.b16 %v402
        %v421 = vunpack.c.l.b16 %v403
        %v422 = vunpack.c.l.b16 %v404
        %v423 = vunpack.c.l.b16 %v405
        %v424 = vunpack.c.l.b16 %v406
        %v425 = vunpack.c.l.b16 %v407
        %v426 = vpack.c.b16 %v419, %v418
        %v427 = vpack.c.b16 %v421, %v420
        %v428 = vpack.c.b16 %v423, %v422
        %v429 = vpack.c.b16 %v425, %v424
        %vm430 = vcmask 130048
        %v432 = vsel %vm430, %v426, 0
        %v435 = vsel %vm430, %v427, 0
        %v438 = vsel %vm430, %v428, 0
        %v441 = vsel %vm430, %v429, 0
        %443 = vmatprep.subr.bf16.mxu0 0
        %444 = vmatpush1.bf16.msra.mxu0 0
        %445 = vmatprep.subr.bf16.mxu0 0
        %446 = vmatpush1.bf16.msra.mxu0 0
        %447 = vmatprep.subr.bf16.mxu0 0
        %448 = vmatpush1.bf16.msra.mxu0 0
        %449 = vmatprep.subr.bf16.mxu0 0
        %450 = vmatpush1.bf16.msra.mxu0 0
        %451 = vmatprep.subr.bf16.mxu0 0
        %452 = vmatpush1.bf16.msra.mxu0 0
        %453 = vmatprep.subr.bf16.mxu0 0
        %454 = vmatpush1.bf16.msra.mxu0 0
        %455 = vmatprep.subr.bf16.mxu0 0
        %456 = vmatpush1.bf16.msra.mxu0 0
        %457 = vmatprep.subr.bf16.mxu0 %v409
        %458 = vmatpush1.bf16.msra.mxu0 %v408
        %459 = vmatprep.subr.bf16.mxu0 0
        %460 = vmatpush2.bf16.msra.mxu0 0
        %461 = vmatprep.subr.bf16.mxu0 0
        %462 = vmatpush2.bf16.msra.mxu0 0
        %463 = vmatprep.subr.bf16.mxu0 0
        %464 = vmatpush2.bf16.msra.mxu0 0
        %465 = vmatprep.subr.bf16.mxu0 0
        %466 = vmatpush2.bf16.msra.mxu0 0
        %467 = vmatprep.subr.bf16.mxu0 0
        %468 = vmatpush2.bf16.msra.mxu0 0
        %469 = vmatprep.subr.bf16.mxu0 0
        %470 = vmatpush2.bf16.msra.mxu0 0
        %471 = vmatprep.subr.bf16.mxu0 0
        %472 = vmatpush2.bf16.msra.mxu0 0
        %473 = vmatprep.subr.bf16.mxu0 0
        %474 = vmatpush2.bf16.msra.mxu0 0
        %475 = vmatprep.mubr.bf16.mxu0 0
        %476 = vmatmul.mubr.bf16.gmra.mxu0 %v432
        %v477 = vpop.f32.mrf.mxu0
        %v478 = vadd.f32 0.0, %v477
        %v479 = vpop.f32.mrf.mxu0
        %v480 = vadd.f32 0.0, %v479
        %v481 = vpop.f32.mrf.mxu0
        %v482 = vadd.f32 0.0, %v481
        %v483 = vpop.f32.mrf.mxu0
        %v484 = vadd.f32 0.0, %v483
        %485 = vmatprep.mubr.bf16.mxu0 0
        %486 = vmatmul.mubr.bf16.gmra.mxu0 %v435
        %v487 = vpop.f32.mrf.mxu0
        %v488 = vadd.f32 0.0, %v487
        %v489 = vpop.f32.mrf.mxu0
        %v490 = vadd.f32 0.0, %v489
        %v491 = vpop.f32.mrf.mxu0
        %v492 = vadd.f32 0.0, %v491
        %v493 = vpop.f32.mrf.mxu0
        %v494 = vadd.f32 0.0, %v493
        %495 = vmatprep.mubr.bf16.mxu0 0
        %496 = vmatmul.mubr.bf16.gmra.mxu0 %v438
        %v497 = vpop.f32.mrf.mxu0
        %v498 = vadd.f32 0.0, %v497
        %v499 = vpop.f32.mrf.mxu0
        %v500 = vadd.f32 0.0, %v499
        %v501 = vpop.f32.mrf.mxu0
        %v502 = vadd.f32 0.0, %v501
        %v503 = vpop.f32.mrf.mxu0
        %v504 = vadd.f32 0.0, %v503
        %505 = vmatprep.mubr.bf16.mxu0 0
        %506 = vmatmul.mubr.bf16.gmra.mxu0 %v441
        %v507 = vpop.f32.mrf.mxu0
        %v508 = vadd.f32 0.0, %v507
        %v509 = vpop.f32.mrf.mxu0
        %v510 = vadd.f32 0.0, %v509
        %v511 = vpop.f32.mrf.mxu0
        %v512 = vadd.f32 0.0, %v511
        %v513 = vpop.f32.mrf.mxu0
        %v514 = vadd.f32 0.0, %v513
        %515 = vdwg.mxu0
        %v516 = vmul.f32 %v478, %v350
        %v517 = vmul.f32 %v480, %v398
        %v518 = vmul.f32 %v482, %v351
        %v519 = vmul.f32 %v484, %v399
        %v520 = vmul.f32 %v488, %v350
        %v521 = vmul.f32 %v490, %v398
        %v522 = vmul.f32 %v492, %v351
        %v523 = vmul.f32 %v494, %v399
        %v524 = vmul.f32 %v498, %v350
        %v525 = vmul.f32 %v500, %v398
        %v526 = vmul.f32 %v502, %v351
        %v527 = vmul.f32 %v504, %v399
        %v528 = vmul.f32 %v508, %v350
        %v529 = vmul.f32 %v510, %v398
        %v530 = vmul.f32 %v512, %v351
        %v531 = vmul.f32 %v514, %v399
        %v532 = vadd.f32 %v516, %v518
        %v533 = vrot.slane %v532, 4
        %v534 = vadd.f32 %v532, %v533
        %v535 = vrot.slane %v534, 2
        %v536 = vadd.f32 %v534, %v535
        %v537 = vrot.slane %v536, 1
        %v538 = vadd.f32 %v536, %v537
        %v539 = vadd.f32 %v517, %v519
        %v540 = vrot.slane %v539, 4
        %v541 = vadd.f32 %v539, %v540
        %v542 = vrot.slane %v541, 2
        %v543 = vadd.f32 %v541, %v542
        %v544 = vrot.slane %v543, 1
        %v545 = vadd.f32 %v543, %v544
        %v546 = vadd.f32 %v520, %v522
        %v547 = vrot.slane %v546, 4
        %v548 = vadd.f32 %v546, %v547
        %v549 = vrot.slane %v548, 2
        %v550 = vadd.f32 %v548, %v549
        %v551 = vrot.slane %v550, 1
        %v552 = vadd.f32 %v550, %v551
        %v553 = vadd.f32 %v521, %v523
        %v554 = vrot.slane %v553, 4
        %v555 = vadd.f32 %v553, %v554
        %v556 = vrot.slane %v555, 2
        %v557 = vadd.f32 %v555, %v556
        %v558 = vrot.slane %v557, 1
        %v559 = vadd.f32 %v557, %v558
        %v560 = vadd.f32 %v524, %v526
        %v561 = vrot.slane %v560, 4
        %v562 = vadd.f32 %v560, %v561
        %v563 = vrot.slane %v562, 2
        %v564 = vadd.f32 %v562, %v563
        %v565 = vrot.slane %v564, 1
        %v566 = vadd.f32 %v564, %v565
        %v567 = vadd.f32 %v525, %v527
        %v568 = vrot.slane %v567, 4
        %v569 = vadd.f32 %v567, %v568
        %v570 = vrot.slane %v569, 2
        %v571 = vadd.f32 %v569, %v570
        %v572 = vrot.slane %v571, 1
        %v573 = vadd.f32 %v571, %v572
        %v574 = vadd.f32 %v528, %v530
        %v575 = vrot.slane %v574, 4
        %v576 = vadd.f32 %v574, %v575
        %v577 = vrot.slane %v576, 2
        %v578 = vadd.f32 %v576, %v577
        %v579 = vrot.slane %v578, 1
        %v580 = vadd.f32 %v578, %v579
        %v581 = vadd.f32 %v529, %v531
        %v582 = vrot.slane %v581, 4
        %v583 = vadd.f32 %v581, %v582
        %v584 = vrot.slane %v583, 2
        %v585 = vadd.f32 %v583, %v584
        %v586 = vrot.slane %v585, 1
        %v587 = vadd.f32 %v585, %v586
        %v596 = vcombine.low %v538, %v545
        %v597 = vcombine.low %v552, %v559
        %v598 = vcombine.low %v566, %v573
        %v599 = vcombine.low %v580, %v587
        %v600 = vrot.slane %v597, 7
        %vm601 = vcmask 1041409
        %v602 = vsel %vm601, %v600, %v596
        %vm603 = vcmask 1045509
        %v604 = vsel %vm603, %v600, %v602
        %v605 = vrot.slane %v598, 6
        %vm606 = vcmask 1042434
        %v607 = vsel %vm606, %v605, %v604
        %vm608 = vcmask 1046534
        %v609 = vsel %vm608, %v605, %v607
        %v610 = vrot.slane %v599, 5
        %vm611 = vcmask 1043459
        %v612 = vsel %vm611, %v610, %v609
        %vm613 = vcmask 1047559
        %v614 = vsel %vm613, %v610, %v612
        %616 = vst [vmem:[%s178] sm:$0xff] %v614
        %s617 = sand.u32 %s99, 1
        %s618 = scalar_lea.sflag [#allocation5], %s617
        %s619 = sand.u32 %s99, 1
        %s620 = smul.addr %s619, 8
        %s621 = scalar_lea.vmem [#allocation4], %s620
        // Predicated region
        $region29: #{tpu_custom_call.1} parent=27 // pred_check
          %p622 = pneg %p109
        $region30: #{tpu_custom_call.1} parent=27 // pred_check_branch
          %624 = sbr.rel (%p622) target = $region32
        $region31: #{tpu_custom_call.1} parent=27 // pred_region
          %s625 = smul.u32 2, %s28
          %s627 = ssub.s32 128, 128
          %628 = vsyncadd %s618, %s627
          %s629 = smul.addr %s27, 2
          %s630 = sadd.s32 %s625, %s629
          %s631 = smul.addr %s630, 64
          %s632 = scalar_lea.hbm %s3, %s631
          %s634 = sshll.u32 %s621, 4
          %s635 = int_to_ptr.vmem [resolvable:$true] %s634
          %637 = dma.vmem_to_hbm [thread:$0]  %s635, 128, %s632, %s618
        $region32: #{tpu_custom_call.1} parent=27 // pred_fallthru
          _
      $region28: #{tpu_custom_call.1} parent=5 // pred_fallthru
        _
      %p638 = scmp.le.s32.totalorder 2, %s18
      // Predicated region
      $region33: #{tpu_custom_call.1} parent=5 // pred_check
        %p639 = pneg %p638
      $region34: #{tpu_custom_call.1} parent=5 // pred_check_branch
        %641 = sbr.rel (%p639) target = $region36
      $region35: #{tpu_custom_call.1} parent=5 // pred_region
        %s642 = ssub.s32 %s18, 2
        // Predicated region
        $region37: #{tpu_custom_call.1} parent=35 // pred_check
          %p643 = pneg %p115
        $region38: #{tpu_custom_call.1} parent=35 // pred_check_branch
          %645 = sbr.rel (%p643) target = $region40
        $region39: #{tpu_custom_call.1} parent=35 // pred_region
          %s646 = sand.u32 %s100, 1
          %s647 = scalar_lea.sflag [#allocation5], %s646
          %s648 = sand.u32 %s100, 1
          %s649 = smul.addr %s648, 8
          %s650 = scalar_lea.vmem [#allocation4], %s649
          %651 = dma.done %s647, 128
        $region40: #{tpu_custom_call.1} parent=35 // pred_fallthru
          _
      $region36: #{tpu_custom_call.1} parent=5 // pred_fallthru
        _
    $region6: #{tpu_custom_call.1} parent=1 // loop_footer
      %s22 = sadd.s32 1, %s18
    $region7: #{tpu_custom_call.1} parent=1 // loop_footer_branch
      %17 = sbr.rel target = $region3
    $region8: #{tpu_custom_call.1} parent=1 // loop_exit
      _
    %652 = vsyncpa [#allocation5], 1
    %s653 = scalar_lea.sflag [#allocation5], 1
    %654 = vsyncpa %s653, 1

</llo_original>
